<compile_context>
chip_gen: v5e
topology: v5e:2x2
jax: 0.10.0
libtpu: 0.0.40
codegen_flags: <defaults>
</compile_context>

<pallas_src>
import functools

import jax
import jax.numpy as jnp
from jax.experimental import pallas as pl
from jax.experimental.pallas import tpu as pltpu
from typing import NamedTuple


# ------------------------------- kernels -----------------------------------

def _mlp_resident_kernel(x_ref, w1_ref, b1_ref, w2_ref, b2_ref, o_ref):
    # Layer 1: x @ W1 on the MXU (f32 accumulation), bias + ReLU on the VPU in f32.
    h = jnp.dot(x_ref[...], w1_ref[...], preferred_element_type=jnp.float32)
    h = jnp.maximum(h + b1_ref[...], 0.0)
    # Layer 2: feed the MXU in the weight dtype (bf16 fast path), accumulate in f32.
    h = h.astype(w2_ref.dtype)
    o = jnp.dot(h, w2_ref[...], preferred_element_type=jnp.float32)
    o = jnp.maximum(o + b2_ref[...], 0.0)
    o_ref[...] = o.astype(o_ref.dtype)


def _mlp_streaming_kernel(x_ref, w1_ref, b1_ref, w2_ref, b2_ref, o_ref, acc_ref):
    # Hidden dim tiled along grid axis 1: h_j = relu(x @ W1[:, j] + b1[j]),
    # acc += h_j @ W2[j, :]; finalize (bias + ReLU + store) on the last hidden tile.
    j = pl.program_id(1)

    @pl.when(j == 0)
    def _():
        acc_ref[...] = jnp.zeros_like(acc_ref)

    h = jnp.dot(x_ref[...], w1_ref[...], preferred_element_type=jnp.float32)
    h = jnp.maximum(h + b1_ref[...], 0.0).astype(w2_ref.dtype)
    acc_ref[...] += jnp.dot(h, w2_ref[...], preferred_element_type=jnp.float32)

    @pl.when(j == pl.num_programs(1) - 1)
    def _():
        o = jnp.maximum(acc_ref[...] + b2_ref[...], 0.0)
        o_ref[...] = o.astype(o_ref.dtype)


# ------------------------------- helpers ------------------------------------

def _round_up(n, m):
    return pl.cdiv(n, m) * m


def _vmem_budget_bytes():
    """Generation-aware VMEM working budget (~75% of physical, clamped).

    v5e/v6e (128 MiB) -> 96 MiB ; v7x (64 MiB per TensorCore) -> 48 MiB.
    """
    try:
        cap = int(pltpu.get_tpu_info().vmem_capacity_bytes)
    except Exception:  # hardware-query fallback only; never masks kernel errors
        cap = 64 << 20
    return max(32 << 20, min(100 << 20, (cap * 3) // 4))


@functools.lru_cache(maxsize=None)
def _single_buffered_weights_supported():
    """One-time probe: can grid-invariant blocks request pipeline_mode=pl.Buffered(1)?

    Runs a tiny kernel once and verifies the result, so the real kernel never
    needs a broad try/except (genuine VMEM/compile errors surface normally).
    """
    if not hasattr(pl, "Buffered"):
        return False

    def k(a_ref, b_ref, o_ref):
        o_ref[...] = a_ref[...] + b_ref[...]

    try:
        a = jnp.ones((16, 128), jnp.float32)
        b = jnp.ones((1, 128), jnp.float32)
        out = pl.pallas_call(
            k,
            out_shape=jax.ShapeDtypeStruct((16, 128), jnp.float32),
            grid=(2,),
            in_specs=[
                pl.BlockSpec((8, 128), lambda i: (i, 0)),
                pl.BlockSpec((1, 128), lambda i: (0, 0),
                             pipeline_mode=pl.Buffered(1)),
            ],
            out_specs=pl.BlockSpec((8, 128), lambda i: (i, 0)),
        )(a, b)
        jax.block_until_ready(out)
        return bool(jnp.all(out == 2.0))
    except Exception:
        return False


def _choose_tile_m(B, per_row_bytes, reserved_bytes, budget, cap=1024):
    """Row tile: multiple of 8, as big as the VMEM budget allows (capped), balanced
    over the batch so large B keeps >=2 grid steps (v7x megacore) with small padding."""
    avail = max(budget - reserved_bytes, 4 << 20)
    cap = max(8, min(cap, (avail // max(per_row_bytes, 1)) // 8 * 8))
    b8 = _round_up(B, 8)
    n = pl.cdiv(b8, cap)
    return min(cap, _round_up(pl.cdiv(b8, n), 8))


def _choose_tile_h(H_pad, cap_elems):
    """Largest multiple of 128 that divides H_pad and is <= cap_elems (>=128)."""
    m = H_pad // 128
    cap_units = max(1, cap_elems // 128)
    best = 1
    for d in range(1, m + 1):
        if m % d == 0 and d <= cap_units:
            best = d
    return best * 128


# ------------------------------ public API -----------------------------------

class FeatureExtractorParams(NamedTuple):
    w1: jax.Array   # [D_pad, H_pad] padded, compute dtype
    b1: jax.Array   # [1, H_pad]     padded, f32
    w2: jax.Array   # [H_pad, H_pad] padded, compute dtype
    b2: jax.Array   # [1, H_pad]     padded, f32
    in_dim: int     # original input_dim  (static)
    out_dim: int    # original hidden_dim (static)


def init_feature_extractor(w1, b1, w2, b2, *, compute_dtype=None):
    """Pad/cast the Linear parameters once (hoisted out of the per-call path).

    Feature dims are zero-padded to multiples of 128 (lane-dense stores, full MXU N
    dimension); zero padding is numerically exact through Linear+ReLU in both layers.
    Weights are stored transposed relative to torch.nn.Linear.weight (kernel does x @ W).
    Biases stay f32 (added to the f32 MXU accumulator; v5e-safe VPU epilogue).
    """
    D, H = w1.shape
    assert w2.shape == (H, H)
    w_dtype = jnp.dtype(compute_dtype) if compute_dtype is not None else jnp.dtype(w1.dtype)
    D_pad = _round_up(D, 128)
    H_pad = _round_up(H, 128)
    w1p = jnp.pad(w1, ((0, D_pad - D), (0, H_pad - H))).astype(w_dtype)
    w2p = jnp.pad(w2, ((0, H_pad - H), (0, H_pad - H))).astype(w_dtype)
    b1p = jnp.pad(b1.reshape(1, -1).astype(jnp.float32), ((0, 0), (0, H_pad - H)))
    b2p = jnp.pad(b2.reshape(1, -1).astype(jnp.float32), ((0, 0), (0, H_pad - H)))
    return FeatureExtractorParams(w1p, b1p, w2p, b2p, D, H)


def apply_feature_extractor(params, x, *, tile_m=None, out_dtype=None,
                            force_weight_streaming=False, tile_h=None):
    """Fused MLP forward: relu(relu(x @ W1 + b1) @ W2 + b2)."""
    w1p, b1p, w2p, b2p, D, H = params
    B = x.shape[0]
    assert x.shape[1] == D, f"expected x[:, {D}], got {x.shape}"
    D_pad, H_pad = w1p.shape
    w_dtype = jnp.dtype(w1p.dtype)
    out_dtype = jnp.dtype(out_dtype) if out_dtype is not None else jnp.dtype(x.dtype)
    w_itemsize = w_dtype.itemsize
    out_itemsize = out_dtype.itemsize

    budget = _vmem_budget_bytes()
    single_buf_w = _single_buffered_weights_supported()
    wbuf = 1 if single_buf_w else 2
    resident_w_bytes = wbuf * ((D_pad + H_pad) * H_pad * w_itemsize + 2 * H_pad * 4)
    weight_streaming = force_weight_streaming or resident_w_bytes > (budget * 3) // 5

    # Advisory cost estimate so XLA schedules surrounding ops around the custom call.
    flops = 2 * _round_up(B, 8) * H_pad * (D_pad + H_pad)
    bytes_accessed = (_round_up(B, 8) * D_pad * w_itemsize
                      + (D_pad + H_pad) * H_pad * w_itemsize + 2 * H_pad * 4
                      + _round_up(B, 8) * H_pad * out_itemsize)
    cost = pl.CostEstimate(flops=int(flops), transcendentals=0,
                           bytes_accessed=int(bytes_accessed))

    if not weight_streaming:
        # Resident-weight path: weights stay in VMEM across the whole row grid.
        if tile_m is None:
            per_row = (2 * D_pad * w_itemsize        # x tile, double-buffered
                       + 2 * H_pad * out_itemsize    # out tile, double-buffered
                       + 3 * H_pad * 4)              # f32 h / cast(h) / o intermediates
            tile_m = _choose_tile_m(B, per_row, resident_w_bytes, budget)
        tile_m = _round_up(min(tile_m, _round_up(B, 8)), 8)
    else:
        # Streaming path: tile the hidden dim (W1 columns / W2 rows) on an inner
        # "arbitrary" grid axis with an f32 accumulator (needed when resident
        # weights exceed the VMEM budget, e.g. large hidden sizes on v7x).
        if tile_h is None:
            cap_elems = (budget // 2) // max(2 * (D_pad + H_pad) * w_itemsize, 1)
            tile_h = _choose_tile_h(H_pad, max(128, cap_elems))
        else:
            tile_h = _choose_tile_h(H_pad, max(128, tile_h))
        streamed_w_bytes = (2 * (D_pad + H_pad) * tile_h * w_itemsize
                            + 2 * (tile_h + H_pad) * 4)
        if tile_m is None:
            per_row = (2 * D_pad * w_itemsize
                       + 2 * H_pad * out_itemsize
                       + H_pad * 4                   # f32 accumulator (scratch)
                       + 2 * tile_h * 4 + H_pad * 4)  # h / cast(h) / finalize temps
            tile_m = _choose_tile_m(B, per_row, streamed_w_bytes, budget, cap=512)
        tile_m = _round_up(min(tile_m, _round_up(B, 8)), 8)

    B_pad = _round_up(B, tile_m)

    # Skip the x pad/cast when it is a no-op (avoid an extra HBM pass).
    xp = x
    if (B_pad, D_pad) != (B, D):
        xp = jnp.pad(xp, ((0, B_pad - B), (0, D_pad - D)))
    if xp.dtype != w_dtype:
        xp = xp.astype(w_dtype)

    compiler_kwargs = dict(vmem_limit_bytes=int(budget))

    if not weight_streaming:
        w_kw = {"pipeline_mode": pl.Buffered(1)} if single_buf_w else {}
        out = pl.pallas_call(
            _mlp_resident_kernel,
            out_shape=jax.ShapeDtypeStruct((B_pad, H_pad), out_dtype),
            grid_spec=pltpu.PrefetchScalarGridSpec(
                num_scalar_prefetch=0,
                grid=(B_pad // tile_m,),
                in_specs=[
                    pl.BlockSpec((tile_m, D_pad), lambda i: (i, 0)),        # x tile
                    pl.BlockSpec((D_pad, H_pad), lambda i: (0, 0), **w_kw),  # W1 resident
                    pl.BlockSpec((1, H_pad), lambda i: (0, 0), **w_kw),      # b1 resident
                    pl.BlockSpec((H_pad, H_pad), lambda i: (0, 0), **w_kw),  # W2 resident
                    pl.BlockSpec((1, H_pad), lambda i: (0, 0), **w_kw),      # b2 resident
                ],
                out_specs=pl.BlockSpec((tile_m, H_pad), lambda i: (i, 0)),   # lane-dense
            ),
            compiler_params=pltpu.CompilerParams(
                dimension_semantics=("parallel",), **compiler_kwargs),
            cost_estimate=cost,
        )(xp, w1p, b1p, w2p, b2p)
    else:
        out = pl.pallas_call(
            _mlp_streaming_kernel,
            out_shape=jax.ShapeDtypeStruct((B_pad, H_pad), out_dtype),
            grid_spec=pltpu.PrefetchScalarGridSpec(
                num_scalar_prefetch=0,
                grid=(B_pad // tile_m, H_pad // tile_h),
                in_specs=[
                    pl.BlockSpec((tile_m, D_pad), lambda i, j: (i, 0)),   # x (reused over j)
                    pl.BlockSpec((D_pad, tile_h), lambda i, j: (0, j)),   # W1 column tile
                    pl.BlockSpec((1, tile_h), lambda i, j: (0, j)),       # b1 tile
                    pl.BlockSpec((tile_h, H_pad), lambda i, j: (j, 0)),   # W2 row tile
                    pl.BlockSpec((1, H_pad), lambda i, j: (0, 0)),        # b2 resident
                ],
                out_specs=pl.BlockSpec((tile_m, H_pad), lambda i, j: (i, 0)),
                scratch_shapes=[pltpu.VMEM((tile_m, H_pad), jnp.float32)],
            ),
            compiler_params=pltpu.CompilerParams(
                dimension_semantics=("parallel", "arbitrary"), **compiler_kwargs),
            cost_estimate=cost,
        )(xp, w1p, b1p, w2p, b2p)

    # Slice only when padding was actually added (avoid an extra HBM pass otherwise).
    if B_pad != B or H_pad != H:
        out = out[:B, :H]
    return out


def make_feature_extractor(w1, b1, w2, b2, *, compute_dtype=None, tile_m=None,
                           out_dtype=None):
    """Pad/cast the weights once at init and return a jitted apply(x) closure."""
    params = init_feature_extractor(w1, b1, w2, b2, compute_dtype=compute_dtype)
    _single_buffered_weights_supported()  # run the one-time capability probe eagerly

    def apply(x):
        return apply_feature_extractor(params, x, tile_m=tile_m, out_dtype=out_dtype)

    return jax.jit(apply)


def feature_extractor(x, w1, b1, w2, b2, *, tile_m=None, compute_dtype=None,
                      out_dtype=None, force_weight_streaming=False, tile_h=None):
    """One-shot functional entry point (pads weights per call; prefer
    make_feature_extractor for repeated inference with fixed weights)."""
    params = init_feature_extractor(w1, b1, w2, b2, compute_dtype=compute_dtype)
    return apply_feature_extractor(params, x, tile_m=tile_m, out_dtype=out_dtype,
                                   force_weight_streaming=force_weight_streaming,
                                   tile_h=tile_h)


def feature_extractor_ref(x, w1, b1, w2, b2):
    h = jnp.maximum(x @ w1 + b1.reshape(1, -1), 0.0)
    return jnp.maximum(h @ w2 + b2.reshape(1, -1), 0.0)


if __name__ == "__main__":
    # Small shapes consistent with the module's forward: x [batch, input_dim].
    batch, input_dim, hidden_dim = 8, 16, 32

    key = jax.random.PRNGKey(0)
    kx, k1, k2, k3, k4 = jax.random.split(key, 5)
    x = jax.random.normal(kx, (batch, input_dim), dtype=jnp.float32)
    # PyTorch Linear parameters, stored transposed (kernel computes x @ W + b).
    w1 = jax.random.normal(k1, (input_dim, hidden_dim), dtype=jnp.float32) * 0.1
    b1 = jax.random.normal(k2, (hidden_dim,), dtype=jnp.float32) * 0.1
    w2 = jax.random.normal(k3, (hidden_dim, hidden_dim), dtype=jnp.float32) * 0.1
    b2 = jax.random.normal(k4, (hidden_dim,), dtype=jnp.float32) * 0.1

    ref = feature_extractor_ref(x, w1, b1, w2, b2)

    # Recommended path: pad/cast weights once at init, jitted apply per call (f32).
    apply = make_feature_extractor(w1, b1, w2, b2)
    out = jax.block_until_ready(apply(x))
    assert out.shape == (batch, hidden_dim)
    assert jnp.allclose(out, ref, atol=1e-5, rtol=1e-5), "f32 (init+apply) mismatch"

    # One-shot functional path (f32).
    out2 = jax.block_until_ready(feature_extractor(x, w1, b1, w2, b2))
    assert jnp.allclose(out2, ref, atol=1e-5, rtol=1e-5), "f32 (one-shot) mismatch"

    # bf16 MXU fast path (recommended on v6e/v7x when tolerance allows): f32 accumulation.
    out_bf16 = jax.block_until_ready(
        feature_extractor(x, w1, b1, w2, b2, compute_dtype=jnp.bfloat16))
    assert out_bf16.shape == (batch, hidden_dim)
    assert jnp.allclose(out_bf16, ref, atol=5e-2, rtol=5e-2), "bf16 mismatch"

    # Weight-streaming fallback (chosen automatically when resident weights exceed
    # the VMEM budget, e.g. large hidden sizes on v7x); force it here on a shape
    # with >1 hidden tile so the accumulator path is exercised.
    batch2, in_dim2, hid2 = 20, 48, 160
    kx2, k5, k6, k7, k8 = jax.random.split(jax.random.PRNGKey(1), 5)
    x2 = jax.random.normal(kx2, (batch2, in_dim2), dtype=jnp.float32)
    w1s = jax.random.normal(k5, (in_dim2, hid2), dtype=jnp.float32) * 0.1
    b1s = jax.random.normal(k6, (hid2,), dtype=jnp.float32) * 0.1
    w2s = jax.random.normal(k7, (hid2, hid2), dtype=jnp.float32) * 0.1
    b2s = jax.random.normal(k8, (hid2,), dtype=jnp.float32) * 0.1
    ref_s = feature_extractor_ref(x2, w1s, b1s, w2s, b2s)
    out_s = jax.block_until_ready(
        feature_extractor(x2, w1s, b1s, w2s, b2s,
                          force_weight_streaming=True, tile_h=128))
    assert out_s.shape == (batch2, hid2)
    assert jnp.allclose(out_s, ref_s, atol=1e-4, rtol=1e-4), "streaming path mismatch"

    print("KERNEL_OK")
</pallas_src>

<mosaic_0001>
module attributes {stable_mosaic.version = 11 : i64} {
  func.func @k(%arg0: i32, %arg1: memref<8x128xf32, #tpu.memory_space<vmem>>, %arg2: memref<1x128xf32, #tpu.memory_space<vmem>>, %arg3: memref<8x128xf32, #tpu.memory_space<vmem>>) attributes {dimension_semantics = [#tpu.dimension_semantics<arbitrary>], iteration_bounds = array<i64: 2>, scalar_prefetch = 0 : i64, scratch_operands = 0 : i64, tpu.core_type = #tpu.core_type<tc>, window_params = [{transform_indices = @transform_0, window_bounds = array<i64: 8, 128>}, {pipeline_mode = #tpu.pipeline_mode<synchronous>, transform_indices = @transform_1, window_bounds = array<i64: 1, 128>}, {transform_indices = @transform_2, window_bounds = array<i64: 8, 128>}]} {
    %c0 = arith.constant 0 : index
    %c0_0 = arith.constant 0 : index
    %0 = vector.load %arg1[%c0, %c0_0] : memref<8x128xf32, #tpu.memory_space<vmem>>, vector<8x128xf32>
    %c0_1 = arith.constant 0 : index
    %c0_2 = arith.constant 0 : index
    %1 = vector.load %arg2[%c0_1, %c0_2] : memref<1x128xf32, #tpu.memory_space<vmem>>, vector<1x128xf32>
    %2 = vector.broadcast %1 : vector<1x128xf32> to vector<8x128xf32>
    %3 = arith.addf %0, %2 : vector<8x128xf32>
    %c0_3 = arith.constant 0 : index
    %c0_4 = arith.constant 0 : index
    %4 = vector.load %arg3[%c0_3, %c0_4] : memref<8x128xf32, #tpu.memory_space<vmem>>, vector<8x128xf32>
    tpu.vector_store %arg3[%c0_3, %c0_4], %3 {strides = array<i32>} : memref<8x128xf32, #tpu.memory_space<vmem>>, vector<8x128xf32>,
    return
  }
  func.func @transform_0(%arg0: i32) -> (i32, i32) {
    %c0_i32 = arith.constant 0 : i32
    %c0_i32_0 = arith.constant 0 : i32
    return %arg0, %c0_i32 : i32, i32
  }
  func.func @transform_1(%arg0: i32) -> (i32, i32) {
    %c0_i32 = arith.constant 0 : i32
    %c0_i32_0 = arith.constant 0 : i32
    %c0_i32_1 = arith.constant 0 : i32
    return %c0_i32, %c0_i32_0 : i32, i32
  }
  func.func @transform_2(%arg0: i32) -> (i32, i32) {
    %c0_i32 = arith.constant 0 : i32
    %c0_i32_0 = arith.constant 0 : i32
    return %arg0, %c0_i32 : i32, i32
  }
}

module attributes {stable_mosaic.version = 11 : i64} {
  func.func @_mlp_resident_kernel(%arg0: i32, %arg1: memref<8x128xf32, #tpu.memory_space<vmem>>, %arg2: memref<128x128xf32, #tpu.memory_space<vmem>>, %arg3: memref<1x128xf32, #tpu.memory_space<vmem>>, %arg4: memref<128x128xf32, #tpu.memory_space<vmem>>, %arg5: memref<1x128xf32, #tpu.memory_space<vmem>>, %arg6: memref<8x128xf32, #tpu.memory_space<vmem>>) attributes {dimension_semantics = [#tpu.dimension_semantics<parallel>], iteration_bounds = array<i64: 1>, scalar_prefetch = 0 : i64, scratch_operands = 0 : i64, tpu.core_type = #tpu.core_type<tc>, window_params = [{transform_indices = @transform_0, window_bounds = array<i64: 8, 128>}, {pipeline_mode = #tpu.pipeline_mode<synchronous>, transform_indices = @transform_1, window_bounds = array<i64: 128, 128>}, {pipeline_mode = #tpu.pipeline_mode<synchronous>, transform_indices = @transform_2, window_bounds = array<i64: 1, 128>}, {pipeline_mode = #tpu.pipeline_mode<synchronous>, transform_indices = @transform_3, window_bounds = array<i64: 128, 128>}, {pipeline_mode = #tpu.pipeline_mode<synchronous>, transform_indices = @transform_4, window_bounds = array<i64: 1, 128>}, {transform_indices = @transform_5, window_bounds = array<i64: 8, 128>}]} {
    %c0 = arith.constant 0 : index
    %c0_0 = arith.constant 0 : index
    %0 = vector.load %arg1[%c0, %c0_0] : memref<8x128xf32, #tpu.memory_space<vmem>>, vector<8x128xf32>
    %c0_1 = arith.constant 0 : index
    %c0_2 = arith.constant 0 : index
    %1 = vector.load %arg2[%c0_1, %c0_2] : memref<128x128xf32, #tpu.memory_space<vmem>>, vector<128x128xf32>
    %cst = arith.constant dense<0.000000e+00> : vector<8x128xf32>
    %2 = tpu.matmul %0, %1, %cst {dimension_numbers = #tpu.dot_dimension_numbers<[1], [0], [0], [1], [0, 0, 1, 1], [], []>} : vector<8x128xf32>, vector<128x128xf32>, vector<8x128xf32> -> vector<8x128xf32>
    %c0_3 = arith.constant 0 : index
    %c0_4 = arith.constant 0 : index
    %3 = vector.load %arg3[%c0_3, %c0_4] : memref<1x128xf32, #tpu.memory_space<vmem>>, vector<1x128xf32>
    %4 = vector.broadcast %3 : vector<1x128xf32> to vector<8x128xf32>
    %5 = arith.addf %2, %4 : vector<8x128xf32>
    %cst_5 = arith.constant 0.000000e+00 : f32
    %6 = vector.broadcast %cst_5 : f32 to vector<8x128xf32>
    %7 = arith.maximumf %5, %6 : vector<8x128xf32>
    %c0_6 = arith.constant 0 : index
    %c0_7 = arith.constant 0 : index
    %8 = vector.load %arg4[%c0_6, %c0_7] : memref<128x128xf32, #tpu.memory_space<vmem>>, vector<128x128xf32>
    %cst_8 = arith.constant dense<0.000000e+00> : vector<8x128xf32>
    %9 = tpu.matmul %7, %8, %cst_8 {dimension_numbers = #tpu.dot_dimension_numbers<[1], [0], [0], [1], [0, 0, 1, 1], [], []>} : vector<8x128xf32>, vector<128x128xf32>, vector<8x128xf32> -> vector<8x128xf32>
    %c0_9 = arith.constant 0 : index
    %c0_10 = arith.constant 0 : index
    %10 = vector.load %arg5[%c0_9, %c0_10] : memref<1x128xf32, #tpu.memory_space<vmem>>, vector<1x128xf32>
    %11 = vector.broadcast %10 : vector<1x128xf32> to vector<8x128xf32>
    %12 = arith.addf %9, %11 : vector<8x128xf32>
    %cst_11 = arith.constant 0.000000e+00 : f32
    %13 = vector.broadcast %cst_11 : f32 to vector<8x128xf32>
    %14 = arith.maximumf %12, %13 : vector<8x128xf32>
    %c0_12 = arith.constant 0 : index
    %c0_13 = arith.constant 0 : index
    %15 = vector.load %arg6[%c0_12, %c0_13] : memref<8x128xf32, #tpu.memory_space<vmem>>, vector<8x128xf32>
    tpu.vector_store %arg6[%c0_12, %c0_13], %14 {strides = array<i32>} : memref<8x128xf32, #tpu.memory_space<vmem>>, vector<8x128xf32>,
    return
  }
  func.func @transform_0(%arg0: i32) -> (i32, i32) {
    %c0_i32 = arith.constant 0 : i32
    %c0_i32_0 = arith.constant 0 : i32
    return %arg0, %c0_i32 : i32, i32
  }
  func.func @transform_1(%arg0: i32) -> (i32, i32) {
    %c0_i32 = arith.constant 0 : i32
    %c0_i32_0 = arith.constant 0 : i32
    %c0_i32_1 = arith.constant 0 : i32
    return %c0_i32, %c0_i32_0 : i32, i32
  }
  func.func @transform_2(%arg0: i32) -> (i32, i32) {
    %c0_i32 = arith.constant 0 : i32
    %c0_i32_0 = arith.constant 0 : i32
    %c0_i32_1 = arith.constant 0 : i32
    return %c0_i32, %c0_i32_0 : i32, i32
  }
  func.func @transform_3(%arg0: i32) -> (i32, i32) {
    %c0_i32 = arith.constant 0 : i32
    %c0_i32_0 = arith.constant 0 : i32
    %c0_i32_1 = arith.constant 0 : i32
    return %c0_i32, %c0_i32_0 : i32, i32
  }
  func.func @transform_4(%arg0: i32) -> (i32, i32) {
    %c0_i32 = arith.constant 0 : i32
    %c0_i32_0 = arith.constant 0 : i32
    %c0_i32_1 = arith.constant 0 : i32
    return %c0_i32, %c0_i32_0 : i32, i32
  }
  func.func @transform_5(%arg0: i32) -> (i32, i32) {
    %c0_i32 = arith.constant 0 : i32
    %c0_i32_0 = arith.constant 0 : i32
    return %arg0, %c0_i32 : i32, i32
  }
}

</mosaic_0001>

<llo_original>
// kernel: tpu_custom_call.1
$region0: #{tpu_custom_call.1}
  #allocation0 [shape = 'u32[]', space=smem, size = 0x4, offset = 0x4, fixed_abs, tag = 'smem constant byte address 0x4 - core index']
  #allocation1 [shape = 'u32[72,128]{1,0:T(1,128)}', space=vmem, size = 0x9000, scoped, tag = 'internal scratch']
  %s0 = inlined_call_operand.hbm [shape: f32[16,128], index: 0, kind: input, shape index: {}]
  %s1 = inlined_call_operand.hbm [shape: f32[1,128], index: 1, kind: input, shape index: {}]
  %s2 = inlined_call_operand.hbm [shape: f32[16,128], index: 2, kind: output, shape index: {}]
  %s3 = sld [smem:[#allocation0]]
  $region49: #{tpu_custom_call.1} parent=0
    _
  %s5 = ssub.s32 1, %s3
  %s6 = scalar_select 0, %s5, %s3
  $region1: #{tpu_custom_call.1} parent=0
    #allocation2 [shape = 'u8[8192]{0}', space=vmem, size = 0x2000, scoped, tag = 'input window, operand 0']
    #allocation3 [shape = 's32[2]{0}', space=sflag, size = 0x8, scoped, tag = 'scoped memory for tpu_custom_call.1']
    #allocation4 [shape = 's32[2]{0}', space=sflag, size = 0x8, scoped, tag = 'scoped memory for tpu_custom_call.1']
    #allocation5 [shape = 'u8[512]{0}', space=vmem, size = 0x400, scoped, tag = 'input window, operand 1, single buffered']
    #allocation6 [shape = 's32[1]{0}', space=sflag, size = 0x4, scoped, tag = 'scoped memory for tpu_custom_call.1']
    #allocation7 [shape = 'u8[8192]{0}', space=vmem, size = 0x2000, scoped, tag = 'output window, operand 0']
    %7 = vsyncpa [#allocation3], 0
    %s8 = scalar_lea.sflag [#allocation3], 1
    %9 = vsyncpa %s8, 0
    %10 = vsyncpa [#allocation6], 0
    %11 = vsyncpa [#allocation4], 0
    %s12 = scalar_lea.sflag [#allocation4], 1
    %13 = vsyncpa %s12, 0
    loop: start=0, step=1, limit=4
    $region2: #{tpu_custom_call.1} parent=1 // loop_pre_header
      _
    $region3: #{tpu_custom_call.1} parent=1 // loop_header
      %s15 = sphi 0, %s19
      %p16 = scmp.ge.s32.totalorder %s15, 4
      %s25 = sphi 0, %s27
      %s28 = sphi 0, %s25
      %s29 = sphi 0, %s28
      %s45 = sphi 0, %s29
      %s49 = sphi 0, %s49
      %s51 = sphi 0, %s49
      %s52 = sphi 0, %s51
      %s66 = sphi 0, %s52
      %s72 = sphi 0, %s74
      %s75 = sphi 0, %s72
      %s76 = sphi 0, %s75
      %s92 = sphi 0, %s76
    $region4: #{tpu_custom_call.1} parent=1 // loop_header_branch
      %18 = sbr.rel (%p16) target = $region8
    $region5: #{tpu_custom_call.1} parent=1 // loop_body
      %s20 = ssub.s32 %s15, 1
      %s21 = ssub.s32 %s15, 2
      %s22 = sadd.s32 %s15, 1
      %s23 = ssub.s32 %s15, %s22
      %p24 = scmp.eq.s32.totalorder %s23, 0
      %s26 = sadd.s32 %s25, 1
      %s27 = scalar_select %p24, %s25, %s26
      %p30 = pneg %p24
      %p31 = scmp.eq.s32.totalorder %s15, 1
      %p32 = por %p30, %p31
      %p33 = scmp.ne.s32.totalorder %s25, %s28
      %p34 = scmp.eq.s32.totalorder %s15, 0
      %p35 = por %p33, %p34
      %p36 = scmp.ne.s32.totalorder %s25, %s28
      %p37 = scmp.eq.s32.totalorder %s20, 1
      %p38 = por %p36, %p37
      %p39 = scmp.ne.s32.totalorder %s28, %s29
      %p40 = scmp.eq.s32.totalorder %s20, 0
      %p41 = por %p39, %p40
      %p42 = scmp.ne.s32.totalorder %s28, %s29
      %p43 = scmp.eq.s32.totalorder %s21, 1
      %p44 = por %p42, %p43
      %p46 = scmp.ne.s32.totalorder %s29, %s45
      %p47 = scmp.eq.s32.totalorder %s21, 0
      %p48 = por %p46, %p47
      %s50 = sadd.s32 %s49, 1
      %p53 = scmp.eq.s32.totalorder %s15, 1
      %p54 = scmp.ne.s32.totalorder %s49, %s51
      %p55 = scmp.eq.s32.totalorder %s15, 0
      %p56 = por %p54, %p55
      %p57 = scmp.ne.s32.totalorder %s49, %s51
      %p58 = scmp.eq.s32.totalorder %s20, 1
      %p59 = por %p57, %p58
      %p60 = scmp.ne.s32.totalorder %s51, %s52
      %p61 = scmp.eq.s32.totalorder %s20, 0
      %p62 = por %p60, %p61
      %p63 = scmp.ne.s32.totalorder %s51, %s52
      %p64 = scmp.eq.s32.totalorder %s21, 1
      %p65 = por %p63, %p64
      %p67 = scmp.ne.s32.totalorder %s52, %s66
      %p68 = scmp.eq.s32.totalorder %s21, 0
      %p69 = por %p67, %p68
      %s70 = ssub.s32 %s15, %s22
      %p71 = scmp.eq.s32.totalorder %s70, 0
      %s73 = sadd.s32 %s72, 1
      %s74 = scalar_select %p71, %s72, %s73
      %p77 = pneg %p71
      %p78 = scmp.eq.s32.totalorder %s15, 1
      %p79 = por %p77, %p78
      %p80 = scmp.ne.s32.totalorder %s72, %s75
      %p81 = scmp.eq.s32.totalorder %s15, 0
      %p82 = por %p80, %p81
      %p83 = scmp.ne.s32.totalorder %s72, %s75
      %p84 = scmp.eq.s32.totalorder %s20, 1
      %p85 = por %p83, %p84
      %p86 = scmp.ne.s32.totalorder %s75, %s76
      %p87 = scmp.eq.s32.totalorder %s20, 0
      %p88 = por %p86, %p87
      %p89 = scmp.ne.s32.totalorder %s75, %s76
      %p90 = scmp.eq.s32.totalorder %s21, 1
      %p91 = por %p89, %p90
      %p93 = scmp.ne.s32.totalorder %s76, %s92
      %p94 = scmp.eq.s32.totalorder %s21, 0
      %p95 = por %p93, %p94
      %p96 = scmp.le.s32.totalorder 1, %s15
      %p97 = scmp.lt.s32.totalorder %s15, 3
      %p98 = pnand %p96, %p97
      %p99 = pneg %p98
      // Predicated region
      $region9: #{tpu_custom_call.1} parent=5 // pred_check
        _
      $region10: #{tpu_custom_call.1} parent=5 // pred_check_branch
        %101 = sbr.rel (%p98) target = $region12
      $region11: #{tpu_custom_call.1} parent=5 // pred_region
        %s102 = ssub.s32 %s15, 1
        // Predicated region
        $region13: #{tpu_custom_call.1} parent=11 // pred_check
          %p103 = pneg %p62
        $region14: #{tpu_custom_call.1} parent=11 // pred_check_branch
          %105 = sbr.rel (%p103) target = $region16
        $region15: #{tpu_custom_call.1} parent=11 // pred_region
          %107 = vsyncadd [#allocation6], 0
          %s109 = sshll.u32 %s1, 4
          %s110 = int_to_ptr.hbm [resolvable:$true] %s109
          %s111 = sshll.u32 [#allocation5], 4
          %s112 = int_to_ptr.vmem [resolvable:$true] %s111
          %114 = dma.hbm_to_vmem [thread:$0]  %s110, 16, %s112, [#allocation6]
        $region16: #{tpu_custom_call.1} parent=11 // pred_fallthru
          _
      $region12: #{tpu_custom_call.1} parent=5 // pred_fallthru
        _
      %p115 = scmp.lt.s32.totalorder %s15, 2
      // Predicated region
      $region17: #{tpu_custom_call.1} parent=5 // pred_check
        %p116 = pneg %p115
      $region18: #{tpu_custom_call.1} parent=5 // pred_check_branch
        %118 = sbr.rel (%p116) target = $region20
      $region19: #{tpu_custom_call.1} parent=5 // pred_region
        // Predicated region
        $region21: #{tpu_custom_call.1} parent=19 // pred_check
          %p119 = pneg %p35
        $region22: #{tpu_custom_call.1} parent=19 // pred_check_branch
          %121 = sbr.rel (%p119) target = $region24
        $region23: #{tpu_custom_call.1} parent=19 // pred_region
          %s122 = sand.u32 %s25, 1
          %s123 = scalar_lea.sflag [#allocation3], %s122
          %s124 = sand.u32 %s25, 1
          %s125 = smul.addr %s124, 8
          %s126 = scalar_lea.vmem [#allocation2], %s125
          %128 = vsyncadd %s123, 0
          %s129 = smul.addr %s15, 8
          %s130 = scalar_lea.hbm %s0, %s129
          %s132 = sshll.u32 %s130, 4
          %s133 = int_to_ptr.hbm [resolvable:$true] %s132
          %s134 = sshll.u32 %s126, 4
          %s135 = int_to_ptr.vmem [resolvable:$true] %s134
          %137 = dma.hbm_to_vmem [thread:$0]  %s133, 128, %s135, %s123
        $region24: #{tpu_custom_call.1} parent=19 // pred_fallthru
          _
      $region20: #{tpu_custom_call.1} parent=5 // pred_fallthru
        _
      %p138 = scmp.le.s32.totalorder 1, %s15
      %p139 = scmp.lt.s32.totalorder %s15, 3
      %p140 = pnand %p138, %p139
      %p141 = pneg %p140
      // Predicated region
      $region25: #{tpu_custom_call.1} parent=5 // pred_check
        _
      $region26: #{tpu_custom_call.1} parent=5 // pred_check_branch
        %143 = sbr.rel (%p140) target = $region28
      $region27: #{tpu_custom_call.1} parent=5 // pred_region
        %s144 = ssub.s32 %s15, 1
        %s145 = sand.u32 %s28, 1
        %s146 = scalar_lea.sflag [#allocation3], %s145
        %s147 = sand.u32 %s28, 1
        %s148 = smul.addr %s147, 8
        %s149 = scalar_lea.vmem [#allocation2], %s148
        // Predicated region
        $region29: #{tpu_custom_call.1} parent=27 // pred_check
          %p150 = pneg %p41
        $region30: #{tpu_custom_call.1} parent=27 // pred_check_branch
          %152 = sbr.rel (%p150) target = $region32
        $region31: #{tpu_custom_call.1} parent=27 // pred_region
          %154 = dma.done %s146, 128
        $region32: #{tpu_custom_call.1} parent=27 // pred_fallthru
          _
        // Predicated region
        $region33: #{tpu_custom_call.1} parent=27 // pred_check
          %p155 = pneg %p62
        $region34: #{tpu_custom_call.1} parent=27 // pred_check_branch
          %157 = sbr.rel (%p155) target = $region36
        $region35: #{tpu_custom_call.1} parent=27 // pred_region
          %159 = dma.done [#allocation6], 16
        $region36: #{tpu_custom_call.1} parent=27 // pred_fallthru
          _
        %s160 = sand.u32 %s28, 1
        %s161 = scalar_lea.sflag [#allocation3], %s160
        %s162 = sand.u32 %s28, 1
        %s163 = smul.addr %s162, 8
        %s164 = scalar_lea.vmem [#allocation2], %s163
        %p165 = pneg %p41
        %p166 = pneg %p38
        %p167 = pneg %p62
        %p168 = pneg %p59
        %p169 = pneg %p88
        %p170 = pneg %p85
        %s171 = sand.u32 %s75, 1
        %s172 = scalar_lea.sflag [#allocation4], %s171
        %s173 = sand.u32 %s75, 1
        %s174 = smul.addr %s173, 8
        %s175 = scalar_lea.vmem [#allocation7], %s174
        %v176 = vld [vmem:[%s149] sm:$0xff]
        %v177 = vld [vmem:[#allocation5] sm:$0x1]
        %v179 = vperm.slane %v177, 0
        %v181 = vadd.f32 %v176, %v179
        %182 = vst [vmem:[%s175] sm:$0xff] %v181
        %s183 = sand.u32 %s75, 1
        %s184 = scalar_lea.sflag [#allocation4], %s183
        %s185 = sand.u32 %s75, 1
        %s186 = smul.addr %s185, 8
        %s187 = scalar_lea.vmem [#allocation7], %s186
        // Predicated region
        $region37: #{tpu_custom_call.1} parent=27 // pred_check
          %p188 = pneg %p85
        $region38: #{tpu_custom_call.1} parent=27 // pred_check_branch
          %190 = sbr.rel (%p188) target = $region40
        $region39: #{tpu_custom_call.1} parent=27 // pred_region
          %192 = vsyncadd %s184, 0
          %s193 = smul.addr %s20, 8
          %s194 = scalar_lea.hbm %s2, %s193
          %s196 = sshll.u32 %s187, 4
          %s197 = int_to_ptr.vmem [resolvable:$true] %s196
          %s198 = sshll.u32 %s194, 4
          %s199 = int_to_ptr.hbm [resolvable:$true] %s198
          %201 = dma.vmem_to_hbm [thread:$0]  %s197, 128, %s199, %s184
        $region40: #{tpu_custom_call.1} parent=27 // pred_fallthru
          _
      $region28: #{tpu_custom_call.1} parent=5 // pred_fallthru
        _
      %p202 = scmp.le.s32.totalorder 2, %s15
      // Predicated region
      $region41: #{tpu_custom_call.1} parent=5 // pred_check
        %p203 = pneg %p202
      $region42: #{tpu_custom_call.1} parent=5 // pred_check_branch
        %205 = sbr.rel (%p203) target = $region44
      $region43: #{tpu_custom_call.1} parent=5 // pred_region
        %s206 = ssub.s32 %s15, 2
        // Predicated region
        $region45: #{tpu_custom_call.1} parent=43 // pred_check
          %p207 = pneg %p91
        $region46: #{tpu_custom_call.1} parent=43 // pred_check_branch
          %209 = sbr.rel (%p207) target = $region48
        $region47: #{tpu_custom_call.1} parent=43 // pred_region
          %s210 = sand.u32 %s76, 1
          %s211 = scalar_lea.sflag [#allocation4], %s210
          %s212 = sand.u32 %s76, 1
          %s213 = smul.addr %s212, 8
          %s214 = scalar_lea.vmem [#allocation7], %s213
          %216 = dma.done %s211, 128
        $region48: #{tpu_custom_call.1} parent=43 // pred_fallthru
          _
      $region44: #{tpu_custom_call.1} parent=5 // pred_fallthru
        _
    $region6: #{tpu_custom_call.1} parent=1 // loop_footer
      %s19 = sadd.s32 1, %s15
    $region7: #{tpu_custom_call.1} parent=1 // loop_footer_branch
      %14 = sbr.rel target = $region3
    $region8: #{tpu_custom_call.1} parent=1 // loop_exit
      _
    %217 = vsyncpa [#allocation3], 1
    %s218 = scalar_lea.sflag [#allocation3], 1
    %219 = vsyncpa %s218, 1
    %220 = vsyncpa [#allocation6], 1
    %221 = vsyncpa [#allocation4], 1
    %s222 = scalar_lea.sflag [#allocation4], 1
    %223 = vsyncpa %s222, 1

// kernel: apply.1
$region0: #{apply.1}
  #allocation0 [shape = 'u32[]', space=smem, size = 0x4, offset = 0x4, fixed_abs, tag = 'smem constant byte address 0x4 - core index']
  #allocation1 [shape = 'u32[72,128]{1,0:T(1,128)}', space=vmem, size = 0x9000, scoped, tag = 'internal scratch']
  %s0 = inlined_call_operand.vmem [shape: f32[8,128], index: 0, kind: input, shape index: {}]
  %s1 = inlined_call_operand.hbm [shape: f32[128,128], index: 1, kind: input, shape index: {}]
  %s2 = inlined_call_operand.vmem [shape: f32[1,128], index: 2, kind: input, shape index: {}]
  %s3 = inlined_call_operand.hbm [shape: f32[128,128], index: 3, kind: input, shape index: {}]
  %s4 = inlined_call_operand.vmem [shape: f32[1,128], index: 4, kind: input, shape index: {}]
  %s5 = inlined_call_operand.hbm [shape: f32[8,128], index: 5, kind: output, shape index: {}]
  %s6 = sld [smem:[#allocation0]]
  $region38: #{apply.1} parent=0
    _
  %s8 = ssub.s32 1, %s6
  %s9 = scalar_select 0, %s8, %s6
  $region1: #{apply.1} parent=0
    #allocation2 [shape = 'u8[65536]{0}', space=vmem, size = 0x10000, scoped, tag = 'input window, operand 1, single buffered']
    #allocation3 [shape = 's32[1]{0}', space=sflag, size = 0x4, scoped, tag = 'scoped memory for apply.1']
    #allocation4 [shape = 's32[1]{0}', space=sflag, size = 0x4, scoped, tag = 'scoped memory for apply.1']
    #allocation5 [shape = 'u8[65536]{0}', space=vmem, size = 0x10000, scoped, tag = 'input window, operand 3, single buffered']
    #allocation6 [shape = 's32[1]{0}', space=sflag, size = 0x4, scoped, tag = 'scoped memory for apply.1']
    #allocation7 [shape = 'u8[4096]{0}', space=vmem, size = 0x1000, scoped, tag = 'output window, operand 0, single buffered']
    %10 = vsyncpa [#allocation3], 0
    %11 = vsyncpa [#allocation6], 0
    %12 = vsyncpa [#allocation4], 0
    // Predicated region
    $region2: #{apply.1} parent=1 // pred_check
      _
    $region3: #{apply.1} parent=1 // pred_check_branch
      %14 = sbr.rel (0) target = $region5
    $region4: #{apply.1} parent=1 // pred_region
      _
    $region5: #{apply.1} parent=1 // pred_fallthru
      _
    // Predicated region
    $region6: #{apply.1} parent=1 // pred_check
      _
    $region7: #{apply.1} parent=1 // pred_check_branch
      %16 = sbr.rel (0) target = $region9
    $region8: #{apply.1} parent=1 // pred_region
      %18 = vsyncadd [#allocation3], 0
      %s19 = sshll.u32 %s1, 4
      %s20 = int_to_ptr.hbm [resolvable:$true] %s19
      %s21 = sshll.u32 [#allocation2], 4
      %s22 = int_to_ptr.vmem [resolvable:$true] %s21
      %27 = dma.hbm_to_vmem [thread:$0]  %s20, 2048, %s22, [#allocation3], 128, 128, 8
    $region9: #{apply.1} parent=1 // pred_fallthru
      _
    // Predicated region
    $region10: #{apply.1} parent=1 // pred_check
      _
    $region11: #{apply.1} parent=1 // pred_check_branch
      %29 = sbr.rel (0) target = $region13
    $region12: #{apply.1} parent=1 // pred_region
      _
    $region13: #{apply.1} parent=1 // pred_fallthru
      _
    // Predicated region
    $region14: #{apply.1} parent=1 // pred_check
      _
    $region15: #{apply.1} parent=1 // pred_check_branch
      %31 = sbr.rel (0) target = $region17
    $region16: #{apply.1} parent=1 // pred_region
      %33 = vsyncadd [#allocation6], 0
      %s34 = sshll.u32 %s3, 4
      %s35 = int_to_ptr.hbm [resolvable:$true] %s34
      %s36 = sshll.u32 [#allocation5], 4
      %s37 = int_to_ptr.vmem [resolvable:$true] %s36
      %42 = dma.hbm_to_vmem [thread:$0]  %s35, 2048, %s37, [#allocation6], 128, 128, 8
    $region17: #{apply.1} parent=1 // pred_fallthru
      _
    // Predicated region
    $region18: #{apply.1} parent=1 // pred_check
      _
    $region19: #{apply.1} parent=1 // pred_check_branch
      %44 = sbr.rel (0) target = $region21
    $region20: #{apply.1} parent=1 // pred_region
      _
    $region21: #{apply.1} parent=1 // pred_fallthru
      _
    // Predicated region
    $region22: #{apply.1} parent=1 // pred_check
      _
    $region23: #{apply.1} parent=1 // pred_check_branch
      %46 = sbr.rel (0) target = $region25
    $region24: #{apply.1} parent=1 // pred_region
      %48 = dma.done [#allocation3], 2048
    $region25: #{apply.1} parent=1 // pred_fallthru
      _
    // Predicated region
    $region26: #{apply.1} parent=1 // pred_check
      _
    $region27: #{apply.1} parent=1 // pred_check_branch
      %50 = sbr.rel (0) target = $region29
    $region28: #{apply.1} parent=1 // pred_region
      %52 = dma.done [#allocation6], 2048
    $region29: #{apply.1} parent=1 // pred_fallthru
      _
    %v53 = vld [vmem:[%s0] sm:$0xff]
    %v54 = vld [vmem:[#allocation2] sm:$0xff]
    %v55 = vld [vmem:[#allocation2 + $0x8] sm:$0xff]
    %v56 = vld [vmem:[#allocation2 + $0x10] sm:$0xff]
    %v57 = vld [vmem:[#allocation2 + $0x18] sm:$0xff]
    %v58 = vld [vmem:[#allocation2 + $0x20] sm:$0xff]
    %v59 = vld [vmem:[#allocation2 + $0x28] sm:$0xff]
    %v60 = vld [vmem:[#allocation2 + $0x30] sm:$0xff]
    %v61 = vld [vmem:[#allocation2 + $0x38] sm:$0xff]
    %v62 = vld [vmem:[#allocation2 + $0x40] sm:$0xff]
    %v63 = vld [vmem:[#allocation2 + $0x48] sm:$0xff]
    %v64 = vld [vmem:[#allocation2 + $0x50] sm:$0xff]
    %v65 = vld [vmem:[#allocation2 + $0x58] sm:$0xff]
    %v66 = vld [vmem:[#allocation2 + $0x60] sm:$0xff]
    %v67 = vld [vmem:[#allocation2 + $0x68] sm:$0xff]
    %v68 = vld [vmem:[#allocation2 + $0x70] sm:$0xff]
    %v69 = vld [vmem:[#allocation2 + $0x78] sm:$0xff]
    %v70 = vld [vmem:[%s2] sm:$0x1]
    %v72 = vperm.slane %v70, 0
    %74 = vmatpush.msra.mxu0 %v69
    %75 = vmatpush.msra.mxu0 %v68
    %76 = vmatpush.msra.mxu0 %v67
    %77 = vmatpush.msra.mxu0 %v66
    %78 = vmatpush.msra.mxu0 %v65
    %79 = vmatpush.msra.mxu0 %v64
    %80 = vmatpush.msra.mxu0 %v63
    %81 = vmatpush.msra.mxu0 %v62
    %82 = vmatpush.msra.mxu0 %v61
    %83 = vmatpush.msra.mxu0 %v60
    %84 = vmatpush.msra.mxu0 %v59
    %85 = vmatpush.msra.mxu0 %v58
    %86 = vmatpush.msra.mxu0 %v57
    %87 = vmatpush.msra.mxu0 %v56
    %88 = vmatpush.msra.mxu0 %v55
    %89 = vmatpush.msra.mxu0 %v54
    %90 = vmatmul.f32.gmra.mxu0 %v53
    %v91 = vpop.f32.mrf.mxu0
    %v92 = vadd.f32 %v72, %v91
    %93 = vdwg.mxu0
    %v94 = vmax.f32 %v92, 0.0
    %v95 = vld [vmem:[#allocation5] sm:$0xff]
    %v96 = vld [vmem:[#allocation5 + $0x8] sm:$0xff]
    %v97 = vld [vmem:[#allocation5 + $0x10] sm:$0xff]
    %v98 = vld [vmem:[#allocation5 + $0x18] sm:$0xff]
    %v99 = vld [vmem:[#allocation5 + $0x20] sm:$0xff]
    %v100 = vld [vmem:[#allocation5 + $0x28] sm:$0xff]
    %v101 = vld [vmem:[#allocation5 + $0x30] sm:$0xff]
    %v102 = vld [vmem:[#allocation5 + $0x38] sm:$0xff]
    %v103 = vld [vmem:[#allocation5 + $0x40] sm:$0xff]
    %v104 = vld [vmem:[#allocation5 + $0x48] sm:$0xff]
    %v105 = vld [vmem:[#allocation5 + $0x50] sm:$0xff]
    %v106 = vld [vmem:[#allocation5 + $0x58] sm:$0xff]
    %v107 = vld [vmem:[#allocation5 + $0x60] sm:$0xff]
    %v108 = vld [vmem:[#allocation5 + $0x68] sm:$0xff]
    %v109 = vld [vmem:[#allocation5 + $0x70] sm:$0xff]
    %v110 = vld [vmem:[#allocation5 + $0x78] sm:$0xff]
    %v111 = vld [vmem:[%s4] sm:$0x1]
    %v113 = vperm.slane %v111, 0
    %115 = vmatpush.msra.mxu0 %v110
    %116 = vmatpush.msra.mxu0 %v109
    %117 = vmatpush.msra.mxu0 %v108
    %118 = vmatpush.msra.mxu0 %v107
    %119 = vmatpush.msra.mxu0 %v106
    %120 = vmatpush.msra.mxu0 %v105
    %121 = vmatpush.msra.mxu0 %v104
    %122 = vmatpush.msra.mxu0 %v103
    %123 = vmatpush.msra.mxu0 %v102
    %124 = vmatpush.msra.mxu0 %v101
    %125 = vmatpush.msra.mxu0 %v100
    %126 = vmatpush.msra.mxu0 %v99
    %127 = vmatpush.msra.mxu0 %v98
    %128 = vmatpush.msra.mxu0 %v97
    %129 = vmatpush.msra.mxu0 %v96
    %130 = vmatpush.msra.mxu0 %v95
    %131 = vmatmul.f32.gmra.mxu0 %v94
    %v132 = vpop.f32.mrf.mxu0
    %v133 = vadd.f32 %v113, %v132
    %134 = vdwg.mxu0
    %v135 = vmax.f32 %v133, 0.0
    %136 = vst [vmem:[#allocation7] sm:$0xff] %v135
    // Predicated region
    $region30: #{apply.1} parent=1 // pred_check
      _
    $region31: #{apply.1} parent=1 // pred_check_branch
      %138 = sbr.rel (0) target = $region33
    $region32: #{apply.1} parent=1 // pred_region
      %140 = vsyncadd [#allocation4], 0
      %s142 = sshll.u32 [#allocation7], 4
      %s143 = int_to_ptr.vmem [resolvable:$true] %s142
      %s144 = sshll.u32 %s5, 4
      %s145 = int_to_ptr.hbm [resolvable:$true] %s144
      %147 = dma.vmem_to_hbm [thread:$0]  %s143, 128, %s145, [#allocation4]
    $region33: #{apply.1} parent=1 // pred_fallthru
      _
    // Predicated region
    $region34: #{apply.1} parent=1 // pred_check
      _
    $region35: #{apply.1} parent=1 // pred_check_branch
      %149 = sbr.rel (0) target = $region37
    $region36: #{apply.1} parent=1 // pred_region
      %151 = dma.done [#allocation4], 128
    $region37: #{apply.1} parent=1 // pred_fallthru
      _
    %152 = vsyncpa [#allocation3], 1
    %153 = vsyncpa [#allocation6], 1
    %154 = vsyncpa [#allocation4], 1

</llo_original>
